<compile_context>
chip_gen: v7x
topology: tpu7x:2x2x1
jax: 0.10.0
libtpu: 0.0.40
codegen_flags: <defaults>
</compile_context>

<pallas_src>
import math

import jax
import jax.numpy as jnp
import numpy as np
from jax.experimental import pallas as pl
from jax.experimental.pallas import tpu as pltpu


def _round_up(x, m):
    return ((x + m - 1) // m) * m


def _make_outputnet_kernel(num_hidden, frame_channels, std_floor, compute_dtype):
    fc = frame_channels
    floor = float(std_floor)

    def kernel(ar_ref, x_ref, *refs):
        # refs = [w1_ar, w1_in, b1, (w_l, b_l)*, w_last, b_last, out_ref]
        out_ref = refs[-1]
        wrefs = refs[:-1]

        x = x_ref[0].astype(compute_dtype)      # (tile_n, D_in_pad)
        ar = ar_ref[0].astype(compute_dtype)    # (1, D_ar_pad)

        # First layer: concat(ar, inputs) @ W1 == ar @ W1_ar + inputs @ W1_in.
        w1_ar = wrefs[0][...]
        w1_in = wrefs[1][...]
        b1 = wrefs[2][...]                      # (1, H1) f32
        h = jnp.dot(x, w1_in, preferred_element_type=jnp.float32)
        h = h + jnp.dot(ar, w1_ar, preferred_element_type=jnp.float32)  # bcast (1,H)
        h = jnp.maximum(h + b1, 0.0)

        idx = 3
        for _ in range(num_hidden - 1):
            w = wrefs[idx][...]
            b = wrefs[idx + 1][...]
            idx += 2
            h = jnp.dot(h.astype(compute_dtype), w,
                        preferred_element_type=jnp.float32)
            h = jnp.maximum(h + b, 0.0)

        w_last = wrefs[idx][...]
        b_last = wrefs[idx + 1][...]
        y = jnp.dot(h.astype(compute_dtype), w_last,
                    preferred_element_type=jnp.float32) + b_last

        # Epilogue: numerically stable softplus + std floor, applied only on
        # the std lanes [fc, 2*fc) via a lane mask (keeps everything f32).
        lane = jax.lax.broadcasted_iota(jnp.int32, y.shape, dimension=1)
        is_std = (lane >= fc) & (lane < 2 * fc)
        softplus = jnp.maximum(y, 0.0) + jnp.log(1.0 + jnp.exp(-jnp.abs(y)))
        std = jnp.maximum(softplus, floor)
        out_ref[0] = jnp.where(is_std, std, y).astype(out_ref.dtype)

    return kernel


def outputnet_forward(ar_mels, inputs, hidden_params, last_params, frame_channels,
                      std_floor=0.01, compute_dtype=jnp.bfloat16, max_row_tile=512):
    """Pallas equivalent of Outputnet.forward.

    ar_mels:       (B, d_ar)          f32
    inputs:        (B, N, d_in)       f32
    hidden_params: [(W_l (in,out), b_l (out,))], first W has in = d_ar + d_in
    last_params:   (W_last (h, 2*fc+1), b_last (2*fc+1,))
    returns:       mean (B,N,fc), std (B,N,fc), transition_vector (B,N)
    """
    B, d_ar = ar_mels.shape
    _, N, d_in = inputs.shape
    fc = frame_channels
    out_dim = 2 * fc + 1

    w1, b1 = hidden_params[0]
    assert w1.shape[0] == d_ar + d_in, "first layer expects concat(ar, inputs)"

    f32 = jnp.float32
    d_ar_p = _round_up(d_ar, 128)
    d_in_p = _round_up(d_in, 128)
    h_p = [_round_up(b.shape[0], 128) for (_, b) in hidden_params]
    out_p = _round_up(out_dim, 128)

    tile_n = min(_round_up(max(N, 1), 8), max_row_tile)
    n_pad = _round_up(N, tile_n)
    n_tiles = n_pad // tile_n

    def pad_w(a, r, c):
        return jnp.pad(a.astype(f32),
                       ((0, r - a.shape[0]), (0, c - a.shape[1]))).astype(compute_dtype)

    def pad_b(a, c):
        return jnp.pad(a.astype(f32), (0, c - a.shape[0])).reshape(1, c)

    # First layer weight split into the ar half and the inputs half.
    weight_args = [pad_w(w1[:d_ar, :], d_ar_p, h_p[0]),
                   pad_w(w1[d_ar:, :], d_in_p, h_p[0]),
                   pad_b(b1, h_p[0])]
    weight_specs = [pl.BlockSpec((d_ar_p, h_p[0]), lambda b, n: (0, 0)),
                    pl.BlockSpec((d_in_p, h_p[0]), lambda b, n: (0, 0)),
                    pl.BlockSpec((1, h_p[0]), lambda b, n: (0, 0))]
    prev = h_p[0]
    for li in range(1, len(hidden_params)):
        w, b = hidden_params[li]
        weight_args += [pad_w(w, prev, h_p[li]), pad_b(b, h_p[li])]
        weight_specs += [pl.BlockSpec((prev, h_p[li]), lambda b, n: (0, 0)),
                         pl.BlockSpec((1, h_p[li]), lambda b, n: (0, 0))]
        prev = h_p[li]

    w_last, b_last = last_params
    weight_args += [pad_w(w_last, prev, out_p), pad_b(b_last, out_p)]
    weight_specs += [pl.BlockSpec((prev, out_p), lambda b, n: (0, 0)),
                     pl.BlockSpec((1, out_p), lambda b, n: (0, 0))]

    # Activations: pad feature dims to 128 and N to the row tile (layout plumbing).
    ar_p = jnp.pad(ar_mels.astype(f32), ((0, 0), (0, d_ar_p - d_ar)))
    ar_p = ar_p.reshape(B, 1, d_ar_p).astype(compute_dtype)
    x_p = jnp.pad(inputs.astype(f32),
                  ((0, 0), (0, n_pad - N), (0, d_in_p - d_in))).astype(compute_dtype)

    kernel = _make_outputnet_kernel(len(hidden_params), fc, std_floor, compute_dtype)

    # Cost estimate (helps XLA schedule around the custom call).
    rows = B * n_pad
    k_dims = [d_ar_p + d_in_p] + h_p
    n_dims = h_p + [out_p]
    flops = 2 * rows * sum(k * n for k, n in zip(k_dims, n_dims))
    weight_bytes = sum(int(a.size) * a.dtype.itemsize for a in weight_args)
    bytes_accessed = (int(x_p.size) * x_p.dtype.itemsize
                      + int(ar_p.size) * ar_p.dtype.itemsize
                      + weight_bytes + rows * out_p * 4)
    cost = pl.CostEstimate(flops=flops, transcendentals=rows * out_p,
                           bytes_accessed=bytes_accessed)

    # VMEM budget: resident weights + double-buffered in/out tiles + activations.
    itemsize = jnp.dtype(compute_dtype).itemsize
    tile_bytes = tile_n * (2 * d_in_p * itemsize + 2 * out_p * 4 + 2 * max(h_p) * 4)
    est = weight_bytes + tile_bytes + (1 << 20)
    vmem_limit = int(min(96 * 2**20, max(16 * 2**20, 2 * est)))

    grid_spec = pltpu.PrefetchScalarGridSpec(
        num_scalar_prefetch=0,
        grid=(B, n_tiles),
        in_specs=[pl.BlockSpec((1, 1, d_ar_p), lambda b, n: (b, 0, 0)),
                  pl.BlockSpec((1, tile_n, d_in_p), lambda b, n: (b, n, 0))]
                 + weight_specs,
        out_specs=pl.BlockSpec((1, tile_n, out_p), lambda b, n: (b, n, 0)),
    )

    out = pl.pallas_call(
        kernel,
        out_shape=jax.ShapeDtypeStruct((B, n_pad, out_p), jnp.float32),
        grid_spec=grid_spec,
        compiler_params=pltpu.CompilerParams(
            dimension_semantics=("parallel", "parallel"),
            vmem_limit_bytes=vmem_limit,
        ),
        cost_estimate=cost,
    )(ar_p, x_p, *weight_args)

    out = out[:, :N, :]
    mean = out[..., :fc]
    std = out[..., fc:2 * fc]
    transition_vector = out[..., 2 * fc]
    return mean, std, transition_vector


def outputnet_reference(ar_mels, inputs, hidden_params, last_params,
                        frame_channels, std_floor):
    """Pure-JAX f32 reference matching the PyTorch module."""
    B, N, _ = inputs.shape
    ar = jnp.broadcast_to(ar_mels[:, None, :], (B, N, ar_mels.shape[1]))
    x = jnp.concatenate([ar, inputs], axis=-1)
    for w, b in hidden_params:
        x = jax.nn.relu(x @ w + b)
    w, b = last_params
    y = x @ w + b
    fc = frame_channels
    mean = y[..., :fc]
    std = jnp.maximum(jax.nn.softplus(y[..., fc:2 * fc]), std_floor)
    tv = y[..., 2 * fc]
    return mean, std, tv


if __name__ == "__main__":
    key = jax.random.PRNGKey(0)
    B, N = 2, 8
    encoder_dim = 24          # feature dim of `inputs` (hidden states)
    memory_rnn_dim = 16       # feature dim of `ar_mels` (prenet output)
    frame_channels = 8
    outputnet_size = [32, 32]
    std_floor = 0.01

    input_size = memory_rnn_dim + encoder_dim
    out_size = 2 * frame_channels + 1

    keys = jax.random.split(key, 12)
    ar_mels = jax.random.normal(keys[0], (B, memory_rnn_dim), jnp.float32)
    inputs = jax.random.normal(keys[1], (B, N, encoder_dim), jnp.float32)

    dims = [input_size] + outputnet_size
    hidden_params = []
    for i in range(len(outputnet_size)):
        kin, kout = dims[i], dims[i + 1]
        w = jax.random.normal(keys[2 + 2 * i], (kin, kout), jnp.float32) / math.sqrt(kin)
        b = 0.1 * jax.random.normal(keys[3 + 2 * i], (kout,), jnp.float32)
        hidden_params.append((w, b))
    w_last = jax.random.normal(keys[10], (outputnet_size[-1], out_size),
                               jnp.float32) / math.sqrt(outputnet_size[-1])
    b_last = 0.1 * jax.random.normal(keys[11], (out_size,), jnp.float32)
    last_params = (w_last, b_last)

    mean, std, tvec = jax.block_until_ready(
        outputnet_forward(ar_mels, inputs, hidden_params, last_params,
                          frame_channels, std_floor))

    # Sanity check against the pure-JAX f32 reference (bf16 matmul tolerance).
    mean_r, std_r, tv_r = outputnet_reference(ar_mels, inputs, hidden_params,
                                              last_params, frame_channels, std_floor)
    np.testing.assert_allclose(np.asarray(mean), np.asarray(mean_r), atol=0.1, rtol=0.1)
    np.testing.assert_allclose(np.asarray(std), np.asarray(std_r), atol=0.1, rtol=0.1)
    np.testing.assert_allclose(np.asarray(tvec), np.asarray(tv_r), atol=0.1, rtol=0.1)

    assert mean.shape == (B, N, frame_channels)
    assert std.shape == (B, N, frame_channels)
    assert tvec.shape == (B, N)

    print("KERNEL_OK")
</pallas_src>

<mosaic_0001>
module attributes {stable_mosaic.version = 11 : i64} {
  func.func @kernel(%arg0: i32, %arg1: i32, %arg2: memref<1x1x128xbf16, #tpu.memory_space<vmem>>, %arg3: memref<1x8x128xbf16, #tpu.memory_space<vmem>>, %arg4: memref<128x128xbf16, #tpu.memory_space<vmem>>, %arg5: memref<128x128xbf16, #tpu.memory_space<vmem>>, %arg6: memref<1x128xf32, #tpu.memory_space<vmem>>, %arg7: memref<128x128xbf16, #tpu.memory_space<vmem>>, %arg8: memref<1x128xf32, #tpu.memory_space<vmem>>, %arg9: memref<128x128xbf16, #tpu.memory_space<vmem>>, %arg10: memref<1x128xf32, #tpu.memory_space<vmem>>, %arg11: memref<1x8x128xf32, #tpu.memory_space<vmem>>) attributes {dimension_semantics = [#tpu.dimension_semantics<parallel>, #tpu.dimension_semantics<parallel>], iteration_bounds = array<i64: 2, 1>, scalar_prefetch = 0 : i64, scratch_operands = 0 : i64, tpu.core_type = #tpu.core_type<tc>, window_params = [{transform_indices = @transform_0, window_bounds = array<i64: 1, 1, 128>}, {transform_indices = @transform_1, window_bounds = array<i64: 1, 8, 128>}, {pipeline_mode = #tpu.pipeline_mode<synchronous>, transform_indices = @transform_2, window_bounds = array<i64: 128, 128>}, {pipeline_mode = #tpu.pipeline_mode<synchronous>, transform_indices = @transform_3, window_bounds = array<i64: 128, 128>}, {pipeline_mode = #tpu.pipeline_mode<synchronous>, transform_indices = @transform_4, window_bounds = array<i64: 1, 128>}, {pipeline_mode = #tpu.pipeline_mode<synchronous>, transform_indices = @transform_5, window_bounds = array<i64: 128, 128>}, {pipeline_mode = #tpu.pipeline_mode<synchronous>, transform_indices = @transform_6, window_bounds = array<i64: 1, 128>}, {pipeline_mode = #tpu.pipeline_mode<synchronous>, transform_indices = @transform_7, window_bounds = array<i64: 128, 128>}, {pipeline_mode = #tpu.pipeline_mode<synchronous>, transform_indices = @transform_8, window_bounds = array<i64: 1, 128>}, {transform_indices = @transform_9, window_bounds = array<i64: 1, 8, 128>}]} {
    %c0 = arith.constant 0 : index
    %c0_0 = arith.constant 0 : index
    %c0_1 = arith.constant 0 : index
    %0 = vector.load %arg3[%c0, %c0_0, %c0_1] : memref<1x8x128xbf16, #tpu.memory_space<vmem>>, vector<1x8x128xbf16>
    %1 = vector.shape_cast %0 : vector<1x8x128xbf16> to vector<8x128xbf16>
    %c0_2 = arith.constant 0 : index
    %c0_3 = arith.constant 0 : index
    %c0_4 = arith.constant 0 : index
    %2 = vector.load %arg2[%c0_2, %c0_3, %c0_4] : memref<1x1x128xbf16, #tpu.memory_space<vmem>>, vector<1x1x128xbf16>
    %3 = vector.shape_cast %2 : vector<1x1x128xbf16> to vector<1x128xbf16>
    %c0_5 = arith.constant 0 : index
    %c0_6 = arith.constant 0 : index
    %4 = vector.load %arg4[%c0_5, %c0_6] : memref<128x128xbf16, #tpu.memory_space<vmem>>, vector<128x128xbf16>
    %c0_7 = arith.constant 0 : index
    %c0_8 = arith.constant 0 : index
    %5 = vector.load %arg5[%c0_7, %c0_8] : memref<128x128xbf16, #tpu.memory_space<vmem>>, vector<128x128xbf16>
    %c0_9 = arith.constant 0 : index
    %c0_10 = arith.constant 0 : index
    %6 = vector.load %arg6[%c0_9, %c0_10] : memref<1x128xf32, #tpu.memory_space<vmem>>, vector<1x128xf32>
    %cst = arith.constant dense<0.000000e+00> : vector<8x128xf32>
    %7 = tpu.matmul %1, %5, %cst {dimension_numbers = #tpu.dot_dimension_numbers<[1], [0], [0], [1], [0, 0, 1, 1], [], []>} : vector<8x128xbf16>, vector<128x128xbf16>, vector<8x128xf32> -> vector<8x128xf32>
    %cst_11 = arith.constant dense<0.000000e+00> : vector<1x128xf32>
    %8 = tpu.matmul %3, %4, %cst_11 {dimension_numbers = #tpu.dot_dimension_numbers<[1], [0], [0], [1], [0, 0, 1, 1], [], []>} : vector<1x128xbf16>, vector<128x128xbf16>, vector<1x128xf32> -> vector<1x128xf32>
    %9 = vector.broadcast %8 : vector<1x128xf32> to vector<8x128xf32>
    %10 = arith.addf %7, %9 : vector<8x128xf32>
    %11 = vector.broadcast %6 : vector<1x128xf32> to vector<8x128xf32>
    %12 = arith.addf %10, %11 : vector<8x128xf32>
    %cst_12 = arith.constant 0.000000e+00 : f32
    %13 = vector.broadcast %cst_12 : f32 to vector<8x128xf32>
    %14 = arith.maximumf %12, %13 : vector<8x128xf32>
    %c0_13 = arith.constant 0 : index
    %c0_14 = arith.constant 0 : index
    %15 = vector.load %arg7[%c0_13, %c0_14] : memref<128x128xbf16, #tpu.memory_space<vmem>>, vector<128x128xbf16>
    %c0_15 = arith.constant 0 : index
    %c0_16 = arith.constant 0 : index
    %16 = vector.load %arg8[%c0_15, %c0_16] : memref<1x128xf32, #tpu.memory_space<vmem>>, vector<1x128xf32>
    %17 = arith.truncf %14 : vector<8x128xf32> to vector<8x128xbf16>
    %cst_17 = arith.constant dense<0.000000e+00> : vector<8x128xf32>
    %18 = tpu.matmul %17, %15, %cst_17 {dimension_numbers = #tpu.dot_dimension_numbers<[1], [0], [0], [1], [0, 0, 1, 1], [], []>} : vector<8x128xbf16>, vector<128x128xbf16>, vector<8x128xf32> -> vector<8x128xf32>
    %19 = vector.broadcast %16 : vector<1x128xf32> to vector<8x128xf32>
    %20 = arith.addf %18, %19 : vector<8x128xf32>
    %cst_18 = arith.constant 0.000000e+00 : f32
    %21 = vector.broadcast %cst_18 : f32 to vector<8x128xf32>
    %22 = arith.maximumf %20, %21 : vector<8x128xf32>
    %c0_19 = arith.constant 0 : index
    %c0_20 = arith.constant 0 : index
    %23 = vector.load %arg9[%c0_19, %c0_20] : memref<128x128xbf16, #tpu.memory_space<vmem>>, vector<128x128xbf16>
    %c0_21 = arith.constant 0 : index
    %c0_22 = arith.constant 0 : index
    %24 = vector.load %arg10[%c0_21, %c0_22] : memref<1x128xf32, #tpu.memory_space<vmem>>, vector<1x128xf32>
    %25 = arith.truncf %22 : vector<8x128xf32> to vector<8x128xbf16>
    %cst_23 = arith.constant dense<0.000000e+00> : vector<8x128xf32>
    %26 = tpu.matmul %25, %23, %cst_23 {dimension_numbers = #tpu.dot_dimension_numbers<[1], [0], [0], [1], [0, 0, 1, 1], [], []>} : vector<8x128xbf16>, vector<128x128xbf16>, vector<8x128xf32> -> vector<8x128xf32>
    %27 = vector.broadcast %24 : vector<1x128xf32> to vector<8x128xf32>
    %28 = arith.addf %26, %27 : vector<8x128xf32>
    %29 = tpu.iota {dimensions = array<i32: 1>} : vector<8x128xi32>
    %c8_i32 = arith.constant 8 : i32
    %30 = vector.broadcast %c8_i32 : i32 to vector<8x128xi32>
    %31 = arith.cmpi sge, %29, %30 : vector<8x128xi32>
    %c16_i32 = arith.constant 16 : i32
    %32 = vector.broadcast %c16_i32 : i32 to vector<8x128xi32>
    %33 = arith.cmpi slt, %29, %32 : vector<8x128xi32>
    %34 = arith.andi %31, %33 : vector<8x128xi1>
    %cst_24 = arith.constant 0.000000e+00 : f32
    %35 = vector.broadcast %cst_24 : f32 to vector<8x128xf32>
    %36 = arith.maximumf %28, %35 : vector<8x128xf32>
    %37 = math.absf %28 : vector<8x128xf32>
    %cst_25 = arith.constant 0.000000e+00 : f32
    %38 = vector.broadcast %cst_25 : f32 to vector<8x128xf32>
    %39 = arith.subf %38, %37 : vector<8x128xf32>
    %40 = math.exp %39 : vector<8x128xf32>
    %cst_26 = arith.constant 1.000000e+00 : f32
    %41 = vector.broadcast %cst_26 : f32 to vector<8x128xf32>
    %42 = arith.addf %41, %40 : vector<8x128xf32>
    %43 = math.log %42 : vector<8x128xf32>
    %44 = arith.addf %36, %43 : vector<8x128xf32>
    %cst_27 = arith.constant 0.00999999977 : f32
    %45 = vector.broadcast %cst_27 : f32 to vector<8x128xf32>
    %46 = arith.maximumf %44, %45 : vector<8x128xf32>
    %47 = arith.select %34, %46, %28 : vector<8x128xi1>, vector<8x128xf32>
    %c0_28 = arith.constant 0 : index
    %c0_29 = arith.constant 0 : index
    %c0_30 = arith.constant 0 : index
    %48 = vector.load %arg11[%c0_28, %c0_29, %c0_30] : memref<1x8x128xf32, #tpu.memory_space<vmem>>, vector<1x8x128xf32>
    %49 = vector.shape_cast %48 : vector<1x8x128xf32> to vector<8x128xf32>
    %50 = vector.shape_cast %47 : vector<8x128xf32> to vector<1x8x128xf32>
    tpu.vector_store %arg11[%c0_28, %c0_29, %c0_30], %50 {strides = array<i32>} : memref<1x8x128xf32, #tpu.memory_space<vmem>>, vector<1x8x128xf32>,
    return
  }
  func.func @transform_0(%arg0: i32, %arg1: i32) -> (i32, i32, i32) {
    %c0_i32 = arith.constant 0 : i32
    %c0_i32_0 = arith.constant 0 : i32
    %c0_i32_1 = arith.constant 0 : i32
    return %arg0, %c0_i32, %c0_i32_0 : i32, i32, i32
  }
  func.func @transform_1(%arg0: i32, %arg1: i32) -> (i32, i32, i32) {
    %c0_i32 = arith.constant 0 : i32
    %c0_i32_0 = arith.constant 0 : i32
    return %arg0, %arg1, %c0_i32 : i32, i32, i32
  }
  func.func @transform_2(%arg0: i32, %arg1: i32) -> (i32, i32) {
    %c0_i32 = arith.constant 0 : i32
    %c0_i32_0 = arith.constant 0 : i32
    %c0_i32_1 = arith.constant 0 : i32
    return %c0_i32, %c0_i32_0 : i32, i32
  }
  func.func @transform_3(%arg0: i32, %arg1: i32) -> (i32, i32) {
    %c0_i32 = arith.constant 0 : i32
    %c0_i32_0 = arith.constant 0 : i32
    %c0_i32_1 = arith.constant 0 : i32
    return %c0_i32, %c0_i32_0 : i32, i32
  }
  func.func @transform_4(%arg0: i32, %arg1: i32) -> (i32, i32) {
    %c0_i32 = arith.constant 0 : i32
    %c0_i32_0 = arith.constant 0 : i32
    %c0_i32_1 = arith.constant 0 : i32
    return %c0_i32, %c0_i32_0 : i32, i32
  }
  func.func @transform_5(%arg0: i32, %arg1: i32) -> (i32, i32) {
    %c0_i32 = arith.constant 0 : i32
    %c0_i32_0 = arith.constant 0 : i32
    %c0_i32_1 = arith.constant 0 : i32
    return %c0_i32, %c0_i32_0 : i32, i32
  }
  func.func @transform_6(%arg0: i32, %arg1: i32) -> (i32, i32) {
    %c0_i32 = arith.constant 0 : i32
    %c0_i32_0 = arith.constant 0 : i32
    %c0_i32_1 = arith.constant 0 : i32
    return %c0_i32, %c0_i32_0 : i32, i32
  }
  func.func @transform_7(%arg0: i32, %arg1: i32) -> (i32, i32) {
    %c0_i32 = arith.constant 0 : i32
    %c0_i32_0 = arith.constant 0 : i32
    %c0_i32_1 = arith.constant 0 : i32
    return %c0_i32, %c0_i32_0 : i32, i32
  }
  func.func @transform_8(%arg0: i32, %arg1: i32) -> (i32, i32) {
    %c0_i32 = arith.constant 0 : i32
    %c0_i32_0 = arith.constant 0 : i32
    %c0_i32_1 = arith.constant 0 : i32
    return %c0_i32, %c0_i32_0 : i32, i32
  }
  func.func @transform_9(%arg0: i32, %arg1: i32) -> (i32, i32, i32) {
    %c0_i32 = arith.constant 0 : i32
    %c0_i32_0 = arith.constant 0 : i32
    return %arg0, %arg1, %c0_i32 : i32, i32, i32
  }
}

</mosaic_0001>

<llo_original>
// kernel: tpu_custom_call.1
$region0: #{tpu_custom_call.1}
  #allocation0 [shape = 'u32[]', space=smem, size = 0x4, offset = 0x4, fixed_abs, tag = 'smem constant byte address 0x4 - core index']
  #allocation1 [shape = 'u32[144,128]{1,0:T(1,128)}', space=vmem, size = 0x12000, scoped, tag = 'internal scratch']
  %s0 = inlined_call_operand.vmem [shape: bf16[2,1,128], index: 0, kind: input, shape index: {}]
  %s1 = inlined_call_operand.hbm [shape: bf16[2,8,128], index: 1, kind: input, shape index: {}]
  %s2 = inlined_call_operand.hbm [shape: bf16[128,128], index: 2, kind: input, shape index: {}]
  %s3 = inlined_call_operand.hbm [shape: bf16[128,128], index: 3, kind: input, shape index: {}]
  %s4 = inlined_call_operand.vmem [shape: f32[1,128], index: 4, kind: input, shape index: {}]
  %s5 = inlined_call_operand.hbm [shape: bf16[128,128], index: 5, kind: input, shape index: {}]
  %s6 = inlined_call_operand.vmem [shape: f32[1,128], index: 6, kind: input, shape index: {}]
  %s7 = inlined_call_operand.hbm [shape: bf16[128,128], index: 7, kind: input, shape index: {}]
  %s8 = inlined_call_operand.vmem [shape: f32[1,128], index: 8, kind: input, shape index: {}]
  %s9 = inlined_call_operand.hbm [shape: f32[2,8,128], index: 9, kind: output, shape index: {}]
  %s10 = sld [smem:[#allocation0]]
  $region89: #{tpu_custom_call.1} parent=0
    _
  %s12 = ssub.s32 1, %s10
  %s13 = scalar_select 0, %s12, %s10
  $region1: #{tpu_custom_call.1} parent=0
    #allocation2 [shape = 'u8[4096]{0}', space=vmem, size = 0x1000, scoped, tag = 'input window, operand 1']
    #allocation3 [shape = 's32[2]{0}', space=sflag, size = 0x8, scoped, tag = 'scoped memory for tpu_custom_call.1']
    #allocation4 [shape = 's32[2]{0}', space=sflag, size = 0x8, scoped, tag = 'scoped memory for tpu_custom_call.1']
    #allocation5 [shape = 'u8[32768]{0}', space=vmem, size = 0x8000, scoped, tag = 'input window, operand 2, single buffered']
    #allocation6 [shape = 's32[1]{0}', space=sflag, size = 0x4, scoped, tag = 'scoped memory for tpu_custom_call.1']
    #allocation7 [shape = 'u8[32768]{0}', space=vmem, size = 0x8000, scoped, tag = 'input window, operand 3, single buffered']
    #allocation8 [shape = 'u8[32768]{0}', space=vmem, size = 0x8000, scoped, tag = 'input window, operand 5, single buffered']
    #allocation9 [shape = 's32[1]{0}', space=sflag, size = 0x4, scoped, tag = 'scoped memory for tpu_custom_call.1']
    #allocation10 [shape = 'u8[32768]{0}', space=vmem, size = 0x8000, scoped, tag = 'input window, operand 7, single buffered']
    #allocation11 [shape = 'u8[8192]{0}', space=vmem, size = 0x2000, scoped, tag = 'output window, operand 0']
    %14 = vsyncpa [#allocation3], 0
    %s15 = scalar_lea.sflag [#allocation3], 1
    %16 = vsyncpa %s15, 0
    %17 = vsyncpa [#allocation6], 0
    %18 = vsyncpa [#allocation9], 0
    %19 = vsyncpa [#allocation4], 0
    %s20 = scalar_lea.sflag [#allocation4], 1
    %21 = vsyncpa %s20, 0
    loop: start=0, step=1, limit=4
    $region2: #{tpu_custom_call.1} parent=1 // loop_pre_header
      _
    $region3: #{tpu_custom_call.1} parent=1 // loop_header
      %s23 = sphi 0, %s27
      %p24 = scmp.ge.s32.totalorder %s23, 4
      %s30 = sphi 0, %s42
      %s31 = sphi 0, %s38
      %s32 = sphi 0, %s30
      %s33 = sphi 0, %s31
      %s34 = sphi 0, %s32
      %s35 = sphi 0, %s33
      %s45 = sphi 0, %s47
      %s48 = sphi 0, %s45
      %s49 = sphi 0, %s48
      %s65 = sphi 0, %s49
      %s73 = sphi 0, %s75
      %s76 = sphi 0, %s73
      %s77 = sphi 0, %s76
      %s93 = sphi 0, %s77
      %s97 = sphi 0, %s97
      %s99 = sphi 0, %s97
      %s100 = sphi 0, %s99
      %s114 = sphi 0, %s100
      %s118 = sphi 0, %s118
      %s120 = sphi 0, %s118
      %s121 = sphi 0, %s120
      %s135 = sphi 0, %s121
      %s139 = sphi 0, %s139
      %s141 = sphi 0, %s139
      %s142 = sphi 0, %s141
      %s156 = sphi 0, %s142
      %s160 = sphi 0, %s160
      %s162 = sphi 0, %s160
      %s163 = sphi 0, %s162
      %s177 = sphi 0, %s163
      %s181 = sphi 0, %s181
      %s183 = sphi 0, %s181
      %s184 = sphi 0, %s183
      %s198 = sphi 0, %s184
      %s202 = sphi 0, %s202
      %s204 = sphi 0, %s202
      %s205 = sphi 0, %s204
      %s219 = sphi 0, %s205
      %s223 = sphi 0, %s223
      %s225 = sphi 0, %s223
      %s226 = sphi 0, %s225
      %s240 = sphi 0, %s226
      %s248 = sphi 0, %s250
      %s251 = sphi 0, %s248
      %s252 = sphi 0, %s251
      %s268 = sphi 0, %s252
    $region4: #{tpu_custom_call.1} parent=1 // loop_header_branch
      %26 = sbr.rel (%p24) target = $region8
    $region5: #{tpu_custom_call.1} parent=1 // loop_body
      %s28 = ssub.s32 %s23, 1
      %s29 = ssub.s32 %s23, 2
      %s36 = sadd.s32 1, %s31
      %p37 = scmp.ge.s32.totalorder %s36, 1
      %s38 = scalar_select %p37, 0, %s36
      %s39 = sadd.s32 1, %s30
      %s40 = scalar_select %p37, %s39, %s30
      %p41 = scmp.ge.s32.totalorder %s40, 2
      %s42 = scalar_select %p41, 0, %s40
      %s43 = ssub.s32 %s30, %s42
      %p44 = scmp.eq.s32.totalorder %s43, 0
      %s46 = sadd.s32 %s45, 1
      %s47 = scalar_select %p44, %s45, %s46
      %p50 = pneg %p44
      %p51 = scmp.eq.s32.totalorder %s23, 1
      %p52 = por %p50, %p51
      %p53 = scmp.ne.s32.totalorder %s45, %s48
      %p54 = scmp.eq.s32.totalorder %s23, 0
      %p55 = por %p53, %p54
      %p56 = scmp.ne.s32.totalorder %s45, %s48
      %p57 = scmp.eq.s32.totalorder %s28, 1
      %p58 = por %p56, %p57
      %p59 = scmp.ne.s32.totalorder %s48, %s49
      %p60 = scmp.eq.s32.totalorder %s28, 0
      %p61 = por %p59, %p60
      %p62 = scmp.ne.s32.totalorder %s48, %s49
      %p63 = scmp.eq.s32.totalorder %s29, 1
      %p64 = por %p62, %p63
      %p66 = scmp.ne.s32.totalorder %s49, %s65
      %p67 = scmp.eq.s32.totalorder %s29, 0
      %p68 = por %p66, %p67
      %s69 = ssub.s32 %s30, %s42
      %s70 = ssub.s32 %s31, %s38
      %s71 = sor.u32 %s69, %s70
      %p72 = scmp.eq.s32.totalorder %s71, 0
      %s74 = sadd.s32 %s73, 1
      %s75 = scalar_select %p72, %s73, %s74
      %p78 = pneg %p72
      %p79 = scmp.eq.s32.totalorder %s23, 1
      %p80 = por %p78, %p79
      %p81 = scmp.ne.s32.totalorder %s73, %s76
      %p82 = scmp.eq.s32.totalorder %s23, 0
      %p83 = por %p81, %p82
      %p84 = scmp.ne.s32.totalorder %s73, %s76
      %p85 = scmp.eq.s32.totalorder %s28, 1
      %p86 = por %p84, %p85
      %p87 = scmp.ne.s32.totalorder %s76, %s77
      %p88 = scmp.eq.s32.totalorder %s28, 0
      %p89 = por %p87, %p88
      %p90 = scmp.ne.s32.totalorder %s76, %s77
      %p91 = scmp.eq.s32.totalorder %s29, 1
      %p92 = por %p90, %p91
      %p94 = scmp.ne.s32.totalorder %s77, %s93
      %p95 = scmp.eq.s32.totalorder %s29, 0
      %p96 = por %p94, %p95
      %s98 = sadd.s32 %s97, 1
      %p101 = scmp.eq.s32.totalorder %s23, 1
      %p102 = scmp.ne.s32.totalorder %s97, %s99
      %p103 = scmp.eq.s32.totalorder %s23, 0
      %p104 = por %p102, %p103
      %p105 = scmp.ne.s32.totalorder %s97, %s99
      %p106 = scmp.eq.s32.totalorder %s28, 1
      %p107 = por %p105, %p106
      %p108 = scmp.ne.s32.totalorder %s99, %s100
      %p109 = scmp.eq.s32.totalorder %s28, 0
      %p110 = por %p108, %p109
      %p111 = scmp.ne.s32.totalorder %s99, %s100
      %p112 = scmp.eq.s32.totalorder %s29, 1
      %p113 = por %p111, %p112
      %p115 = scmp.ne.s32.totalorder %s100, %s114
      %p116 = scmp.eq.s32.totalorder %s29, 0
      %p117 = por %p115, %p116
      %s119 = sadd.s32 %s118, 1
      %p122 = scmp.eq.s32.totalorder %s23, 1
      %p123 = scmp.ne.s32.totalorder %s118, %s120
      %p124 = scmp.eq.s32.totalorder %s23, 0
      %p125 = por %p123, %p124
      %p126 = scmp.ne.s32.totalorder %s118, %s120
      %p127 = scmp.eq.s32.totalorder %s28, 1
      %p128 = por %p126, %p127
      %p129 = scmp.ne.s32.totalorder %s120, %s121
      %p130 = scmp.eq.s32.totalorder %s28, 0
      %p131 = por %p129, %p130
      %p132 = scmp.ne.s32.totalorder %s120, %s121
      %p133 = scmp.eq.s32.totalorder %s29, 1
      %p134 = por %p132, %p133
      %p136 = scmp.ne.s32.totalorder %s121, %s135
      %p137 = scmp.eq.s32.totalorder %s29, 0
      %p138 = por %p136, %p137
      %s140 = sadd.s32 %s139, 1
      %p143 = scmp.eq.s32.totalorder %s23, 1
      %p144 = scmp.ne.s32.totalorder %s139, %s141
      %p145 = scmp.eq.s32.totalorder %s23, 0
      %p146 = por %p144, %p145
      %p147 = scmp.ne.s32.totalorder %s139, %s141
      %p148 = scmp.eq.s32.totalorder %s28, 1
      %p149 = por %p147, %p148
      %p150 = scmp.ne.s32.totalorder %s141, %s142
      %p151 = scmp.eq.s32.totalorder %s28, 0
      %p152 = por %p150, %p151
      %p153 = scmp.ne.s32.totalorder %s141, %s142
      %p154 = scmp.eq.s32.totalorder %s29, 1
      %p155 = por %p153, %p154
      %p157 = scmp.ne.s32.totalorder %s142, %s156
      %p158 = scmp.eq.s32.totalorder %s29, 0
      %p159 = por %p157, %p158
      %s161 = sadd.s32 %s160, 1
      %p164 = scmp.eq.s32.totalorder %s23, 1
      %p165 = scmp.ne.s32.totalorder %s160, %s162
      %p166 = scmp.eq.s32.totalorder %s23, 0
      %p167 = por %p165, %p166
      %p168 = scmp.ne.s32.totalorder %s160, %s162
      %p169 = scmp.eq.s32.totalorder %s28, 1
      %p170 = por %p168, %p169
      %p171 = scmp.ne.s32.totalorder %s162, %s163
      %p172 = scmp.eq.s32.totalorder %s28, 0
      %p173 = por %p171, %p172
      %p174 = scmp.ne.s32.totalorder %s162, %s163
      %p175 = scmp.eq.s32.totalorder %s29, 1
      %p176 = por %p174, %p175
      %p178 = scmp.ne.s32.totalorder %s163, %s177
      %p179 = scmp.eq.s32.totalorder %s29, 0
      %p180 = por %p178, %p179
      %s182 = sadd.s32 %s181, 1
      %p185 = scmp.eq.s32.totalorder %s23, 1
      %p186 = scmp.ne.s32.totalorder %s181, %s183
      %p187 = scmp.eq.s32.totalorder %s23, 0
      %p188 = por %p186, %p187
      %p189 = scmp.ne.s32.totalorder %s181, %s183
      %p190 = scmp.eq.s32.totalorder %s28, 1
      %p191 = por %p189, %p190
      %p192 = scmp.ne.s32.totalorder %s183, %s184
      %p193 = scmp.eq.s32.totalorder %s28, 0
      %p194 = por %p192, %p193
      %p195 = scmp.ne.s32.totalorder %s183, %s184
      %p196 = scmp.eq.s32.totalorder %s29, 1
      %p197 = por %p195, %p196
      %p199 = scmp.ne.s32.totalorder %s184, %s198
      %p200 = scmp.eq.s32.totalorder %s29, 0
      %p201 = por %p199, %p200
      %s203 = sadd.s32 %s202, 1
      %p206 = scmp.eq.s32.totalorder %s23, 1
      %p207 = scmp.ne.s32.totalorder %s202, %s204
      %p208 = scmp.eq.s32.totalorder %s23, 0
      %p209 = por %p207, %p208
      %p210 = scmp.ne.s32.totalorder %s202, %s204
      %p211 = scmp.eq.s32.totalorder %s28, 1
      %p212 = por %p210, %p211
      %p213 = scmp.ne.s32.totalorder %s204, %s205
      %p214 = scmp.eq.s32.totalorder %s28, 0
      %p215 = por %p213, %p214
      %p216 = scmp.ne.s32.totalorder %s204, %s205
      %p217 = scmp.eq.s32.totalorder %s29, 1
      %p218 = por %p216, %p217
      %p220 = scmp.ne.s32.totalorder %s205, %s219
      %p221 = scmp.eq.s32.totalorder %s29, 0
      %p222 = por %p220, %p221
      %s224 = sadd.s32 %s223, 1
      %p227 = scmp.eq.s32.totalorder %s23, 1
      %p228 = scmp.ne.s32.totalorder %s223, %s225
      %p229 = scmp.eq.s32.totalorder %s23, 0
      %p230 = por %p228, %p229
      %p231 = scmp.ne.s32.totalorder %s223, %s225
      %p232 = scmp.eq.s32.totalorder %s28, 1
      %p233 = por %p231, %p232
      %p234 = scmp.ne.s32.totalorder %s225, %s226
      %p235 = scmp.eq.s32.totalorder %s28, 0
      %p236 = por %p234, %p235
      %p237 = scmp.ne.s32.totalorder %s225, %s226
      %p238 = scmp.eq.s32.totalorder %s29, 1
      %p239 = por %p237, %p238
      %p241 = scmp.ne.s32.totalorder %s226, %s240
      %p242 = scmp.eq.s32.totalorder %s29, 0
      %p243 = por %p241, %p242
      %s244 = ssub.s32 %s30, %s42
      %s245 = ssub.s32 %s31, %s38
      %s246 = sor.u32 %s244, %s245
      %p247 = scmp.eq.s32.totalorder %s246, 0
      %s249 = sadd.s32 %s248, 1
      %s250 = scalar_select %p247, %s248, %s249
      %p253 = pneg %p247
      %p254 = scmp.eq.s32.totalorder %s23, 1
      %p255 = por %p253, %p254
      %p256 = scmp.ne.s32.totalorder %s248, %s251
      %p257 = scmp.eq.s32.totalorder %s23, 0
      %p258 = por %p256, %p257
      %p259 = scmp.ne.s32.totalorder %s248, %s251
      %p260 = scmp.eq.s32.totalorder %s28, 1
      %p261 = por %p259, %p260
      %p262 = scmp.ne.s32.totalorder %s251, %s252
      %p263 = scmp.eq.s32.totalorder %s28, 0
      %p264 = por %p262, %p263
      %p265 = scmp.ne.s32.totalorder %s251, %s252
      %p266 = scmp.eq.s32.totalorder %s29, 1
      %p267 = por %p265, %p266
      %p269 = scmp.ne.s32.totalorder %s252, %s268
      %p270 = scmp.eq.s32.totalorder %s29, 0
      %p271 = por %p269, %p270
      %p272 = scmp.le.s32.totalorder 1, %s23
      %p273 = scmp.lt.s32.totalorder %s23, 3
      %p274 = pnand %p272, %p273
      %p275 = pneg %p274
      // Predicated region
      $region9: #{tpu_custom_call.1} parent=5 // pred_check
        _
      $region10: #{tpu_custom_call.1} parent=5 // pred_check_branch
        %277 = sbr.rel (%p274) target = $region12
      $region11: #{tpu_custom_call.1} parent=5 // pred_region
        %s278 = ssub.s32 %s23, 1
        // Predicated region
        $region13: #{tpu_custom_call.1} parent=11 // pred_check
          %p279 = pneg %p110
        $region14: #{tpu_custom_call.1} parent=11 // pred_check_branch
          %281 = sbr.rel (%p279) target = $region16
        $region15: #{tpu_custom_call.1} parent=11 // pred_region
          %s283 = ssub.s32 1024, 1024
          %284 = vsyncadd [#allocation6], %s283
          %s285 = sshll.u32 [#allocation5], 4
          %s286 = int_to_ptr.vmem [resolvable:$true] %s285
          %291 = dma.hbm_to_vmem [thread:$0]  %s2, 1024, %s286, [#allocation6], 64, 64, 4
        $region16: #{tpu_custom_call.1} parent=11 // pred_fallthru
          _
        // Predicated region
        $region17: #{tpu_custom_call.1} parent=11 // pred_check
          %p292 = pneg %p131
        $region18: #{tpu_custom_call.1} parent=11 // pred_check_branch
          %294 = sbr.rel (%p292) target = $region20
        $region19: #{tpu_custom_call.1} parent=11 // pred_region
          %s296 = ssub.s32 1024, 1024
          %297 = vsyncadd [#allocation6], %s296
          %s298 = sshll.u32 [#allocation7], 4
          %s299 = int_to_ptr.vmem [resolvable:$true] %s298
          %304 = dma.hbm_to_vmem [thread:$0]  %s3, 1024, %s299, [#allocation6], 64, 64, 4
        $region20: #{tpu_custom_call.1} parent=11 // pred_fallthru
          _
        // Predicated region
        $region21: #{tpu_custom_call.1} parent=11 // pred_check
          %p305 = pneg %p152
        $region22: #{tpu_custom_call.1} parent=11 // pred_check_branch
          %307 = sbr.rel (%p305) target = $region24
        $region23: #{tpu_custom_call.1} parent=11 // pred_region
          _
        $region24: #{tpu_custom_call.1} parent=11 // pred_fallthru
          _
        // Predicated region
        $region25: #{tpu_custom_call.1} parent=11 // pred_check
          %p308 = pneg %p173
        $region26: #{tpu_custom_call.1} parent=11 // pred_check_branch
          %310 = sbr.rel (%p308) target = $region28
        $region27: #{tpu_custom_call.1} parent=11 // pred_region
          %s312 = ssub.s32 1024, 1024
          %313 = vsyncadd [#allocation9], %s312
          %s314 = sshll.u32 [#allocation8], 4
          %s315 = int_to_ptr.vmem [resolvable:$true] %s314
          %320 = dma.hbm_to_vmem [thread:$0]  %s5, 1024, %s315, [#allocation9], 64, 64, 4
        $region28: #{tpu_custom_call.1} parent=11 // pred_fallthru
          _
        // Predicated region
        $region29: #{tpu_custom_call.1} parent=11 // pred_check
          %p321 = pneg %p194
        $region30: #{tpu_custom_call.1} parent=11 // pred_check_branch
          %323 = sbr.rel (%p321) target = $region32
        $region31: #{tpu_custom_call.1} parent=11 // pred_region
          _
        $region32: #{tpu_custom_call.1} parent=11 // pred_fallthru
          _
        // Predicated region
        $region33: #{tpu_custom_call.1} parent=11 // pred_check
          %p324 = pneg %p215
        $region34: #{tpu_custom_call.1} parent=11 // pred_check_branch
          %326 = sbr.rel (%p324) target = $region36
        $region35: #{tpu_custom_call.1} parent=11 // pred_region
          %s328 = ssub.s32 1024, 1024
          %329 = vsyncadd [#allocation9], %s328
          %s330 = sshll.u32 [#allocation10], 4
          %s331 = int_to_ptr.vmem [resolvable:$true] %s330
          %336 = dma.hbm_to_vmem [thread:$0]  %s7, 1024, %s331, [#allocation9], 64, 64, 4
        $region36: #{tpu_custom_call.1} parent=11 // pred_fallthru
          _
        // Predicated region
        $region37: #{tpu_custom_call.1} parent=11 // pred_check
          %p337 = pneg %p236
        $region38: #{tpu_custom_call.1} parent=11 // pred_check_branch
          %339 = sbr.rel (%p337) target = $region40
        $region39: #{tpu_custom_call.1} parent=11 // pred_region
          _
        $region40: #{tpu_custom_call.1} parent=11 // pred_fallthru
          _
      $region12: #{tpu_custom_call.1} parent=5 // pred_fallthru
        _
      %p340 = scmp.lt.s32.totalorder %s23, 2
      // Predicated region
      $region41: #{tpu_custom_call.1} parent=5 // pred_check
        %p341 = pneg %p340
      $region42: #{tpu_custom_call.1} parent=5 // pred_check_branch
        %343 = sbr.rel (%p341) target = $region44
      $region43: #{tpu_custom_call.1} parent=5 // pred_region
        // Predicated region
        $region45: #{tpu_custom_call.1} parent=43 // pred_check
          %p344 = pneg %p55
        $region46: #{tpu_custom_call.1} parent=43 // pred_check_branch
          %346 = sbr.rel (%p344) target = $region48
        $region47: #{tpu_custom_call.1} parent=43 // pred_region
          %p347 = scmp.lt.s32.totalorder %s30, 1
          %s348 = scalar_select %p347, %s30, 1
          %s349 = scalar_lea.vmem %s0, %s348
        $region48: #{tpu_custom_call.1} parent=43 // pred_fallthru
          _
        // Predicated region
        $region49: #{tpu_custom_call.1} parent=43 // pred_check
          %p350 = pneg %p83
        $region50: #{tpu_custom_call.1} parent=43 // pred_check_branch
          %352 = sbr.rel (%p350) target = $region52
        $region51: #{tpu_custom_call.1} parent=43 // pred_region
          %s353 = sand.u32 %s73, 1
          %s354 = scalar_lea.sflag [#allocation3], %s353
          %s355 = sand.u32 %s73, 1
          %s356 = smul.addr %s355, 4
          %s357 = scalar_lea.vmem [#allocation2], %s356
          %s359 = ssub.s32 64, 64
          %360 = vsyncadd %s354, %s359
          %s361 = sadd.s32 %s31, %s30
          %s362 = smul.addr %s361, 64
          %s363 = scalar_lea.hbm %s1, %s362
          %s365 = sshll.u32 %s357, 4
          %s366 = int_to_ptr.vmem [resolvable:$true] %s365
          %368 = dma.hbm_to_vmem [thread:$0]  %s363, 64, %s366, %s354
        $region52: #{tpu_custom_call.1} parent=43 // pred_fallthru
          _
      $region44: #{tpu_custom_call.1} parent=5 // pred_fallthru
        _
      %p369 = scmp.le.s32.totalorder 1, %s23
      %p370 = scmp.lt.s32.totalorder %s23, 3
      %p371 = pnand %p369, %p370
      %p372 = pneg %p371
      // Predicated region
      $region53: #{tpu_custom_call.1} parent=5 // pred_check
        _
      $region54: #{tpu_custom_call.1} parent=5 // pred_check_branch
        %374 = sbr.rel (%p371) target = $region56
      $region55: #{tpu_custom_call.1} parent=5 // pred_region
        %s375 = ssub.s32 %s23, 1
        %s376 = sand.u32 %s76, 1
        %s377 = scalar_lea.sflag [#allocation3], %s376
        %s378 = sand.u32 %s76, 1
        %s379 = smul.addr %s378, 4
        %s380 = scalar_lea.vmem [#allocation2], %s379
        // Predicated region
        $region57: #{tpu_custom_call.1} parent=55 // pred_check
          %p381 = pneg %p89
        $region58: #{tpu_custom_call.1} parent=55 // pred_check_branch
          %383 = sbr.rel (%p381) target = $region60
        $region59: #{tpu_custom_call.1} parent=55 // pred_region
          %384 = dma.done %s377, 64
        $region60: #{tpu_custom_call.1} parent=55 // pred_fallthru
          _
        // Predicated region
        $region61: #{tpu_custom_call.1} parent=55 // pred_check
          %p385 = pneg %p110
        $region62: #{tpu_custom_call.1} parent=55 // pred_check_branch
          %387 = sbr.rel (%p385) target = $region64
        $region63: #{tpu_custom_call.1} parent=55 // pred_region
          %388 = dma.done [#allocation6], 1024
        $region64: #{tpu_custom_call.1} parent=55 // pred_fallthru
          _
        // Predicated region
        $region65: #{tpu_custom_call.1} parent=55 // pred_check
          %p389 = pneg %p131
        $region66: #{tpu_custom_call.1} parent=55 // pred_check_branch
          %391 = sbr.rel (%p389) target = $region68
        $region67: #{tpu_custom_call.1} parent=55 // pred_region
          %392 = dma.done [#allocation6], 1024
        $region68: #{tpu_custom_call.1} parent=55 // pred_fallthru
          _
        // Predicated region
        $region69: #{tpu_custom_call.1} parent=55 // pred_check
          %p393 = pneg %p173
        $region70: #{tpu_custom_call.1} parent=55 // pred_check_branch
          %395 = sbr.rel (%p393) target = $region72
        $region71: #{tpu_custom_call.1} parent=55 // pred_region
          %396 = dma.done [#allocation9], 1024
        $region72: #{tpu_custom_call.1} parent=55 // pred_fallthru
          _
        // Predicated region
        $region73: #{tpu_custom_call.1} parent=55 // pred_check
          %p397 = pneg %p215
        $region74: #{tpu_custom_call.1} parent=55 // pred_check_branch
          %399 = sbr.rel (%p397) target = $region76
        $region75: #{tpu_custom_call.1} parent=55 // pred_region
          %400 = dma.done [#allocation9], 1024
        $region76: #{tpu_custom_call.1} parent=55 // pred_fallthru
          _
        %p401 = scmp.lt.s32.totalorder %s32, 1
        %s402 = scalar_select %p401, %s32, 1
        %s403 = scalar_lea.vmem %s0, %s402
        %p404 = pneg %p61
        %p405 = pneg %p58
        %s406 = sand.u32 %s76, 1
        %s407 = scalar_lea.sflag [#allocation3], %s406
        %s408 = sand.u32 %s76, 1
        %s409 = smul.addr %s408, 4
        %s410 = scalar_lea.vmem [#allocation2], %s409
        %p411 = pneg %p89
        %p412 = pneg %p86
        %p413 = pneg %p110
        %p414 = pneg %p107
        %p415 = pneg %p131
        %p416 = pneg %p128
        %p417 = pneg %p152
        %p418 = pneg %p149
        %p419 = pneg %p173
        %p420 = pneg %p170
        %p421 = pneg %p194
        %p422 = pneg %p191
        %p423 = pneg %p215
        %p424 = pneg %p212
        %p425 = pneg %p236
        %p426 = pneg %p233
        %p427 = pneg %p264
        %p428 = pneg %p261
        %s429 = sand.u32 %s251, 1
        %s430 = scalar_lea.sflag [#allocation4], %s429
        %s431 = sand.u32 %s251, 1
        %s432 = smul.addr %s431, 8
        %s433 = scalar_lea.vmem [#allocation11], %s432
        %p434 = scmp.lt.s32.totalorder %s32, 1
        %s435 = scalar_select %p434, %s32, 1
        %s436 = scalar_lea.vmem %s0, %s435
        %v438 = vld [vmem:[%s380] sm:$0xf]
        %v439 = vld [vmem:[%s436] sm:$0x1]
        %v440 = vld [vmem:[#allocation5] sm:$0xf]
        %v441 = vld [vmem:[#allocation5 + $0x4] sm:$0xf]
        %v442 = vld [vmem:[#allocation5 + $0x8] sm:$0xf]
        %v443 = vld [vmem:[#allocation5 + $0xc] sm:$0xf]
        %v444 = vld [vmem:[#allocation5 + $0x10] sm:$0xf]
        %v445 = vld [vmem:[#allocation5 + $0x14] sm:$0xf]
        %v446 = vld [vmem:[#allocation5 + $0x18] sm:$0xf]
        %v447 = vld [vmem:[#allocation5 + $0x1c] sm:$0xf]
        %v448 = vld [vmem:[#allocation5 + $0x20] sm:$0xf]
        %v449 = vld [vmem:[#allocation5 + $0x24] sm:$0xf]
        %v450 = vld [vmem:[#allocation5 + $0x28] sm:$0xf]
        %v451 = vld [vmem:[#allocation5 + $0x2c] sm:$0xf]
        %v452 = vld [vmem:[#allocation5 + $0x30] sm:$0xf]
        %v453 = vld [vmem:[#allocation5 + $0x34] sm:$0xf]
        %v454 = vld [vmem:[#allocation5 + $0x38] sm:$0xf]
        %v455 = vld [vmem:[#allocation5 + $0x3c] sm:$0xf]
        %v456 = vld [vmem:[#allocation7] sm:$0xf]
        %v457 = vld [vmem:[#allocation7 + $0x4] sm:$0xf]
        %v458 = vld [vmem:[#allocation7 + $0x8] sm:$0xf]
        %v459 = vld [vmem:[#allocation7 + $0xc] sm:$0xf]
        %v460 = vld [vmem:[#allocation7 + $0x10] sm:$0xf]
        %v461 = vld [vmem:[#allocation7 + $0x14] sm:$0xf]
        %v462 = vld [vmem:[#allocation7 + $0x18] sm:$0xf]
        %v463 = vld [vmem:[#allocation7 + $0x1c] sm:$0xf]
        %v464 = vld [vmem:[#allocation7 + $0x20] sm:$0xf]
        %v465 = vld [vmem:[#allocation7 + $0x24] sm:$0xf]
        %v466 = vld [vmem:[#allocation7 + $0x28] sm:$0xf]
        %v467 = vld [vmem:[#allocation7 + $0x2c] sm:$0xf]
        %v468 = vld [vmem:[#allocation7 + $0x30] sm:$0xf]
        %v469 = vld [vmem:[#allocation7 + $0x34] sm:$0xf]
        %v470 = vld [vmem:[#allocation7 + $0x38] sm:$0xf]
        %v471 = vld [vmem:[#allocation7 + $0x3c] sm:$0xf]
        %v472 = vld [vmem:[%s4] sm:$0x1]
        %v489 = vunpack.c.l.b16 %v440
        %v490 = vunpack.c.l.b16 %v441
        %v491 = vunpack.c.l.b16 %v442
        %v492 = vunpack.c.l.b16 %v443
        %v493 = vunpack.c.l.b16 %v444
        %v494 = vunpack.c.l.b16 %v445
        %v495 = vunpack.c.l.b16 %v446
        %v496 = vunpack.c.l.b16 %v447
        %v497 = vunpack.c.l.b16 %v448
        %v498 = vunpack.c.l.b16 %v449
        %v499 = vunpack.c.l.b16 %v450
        %v500 = vunpack.c.l.b16 %v451
        %v501 = vunpack.c.l.b16 %v452
        %v502 = vunpack.c.l.b16 %v453
        %v503 = vunpack.c.l.b16 %v454
        %v504 = vunpack.c.l.b16 %v455
        %v505 = vpack.c.b16 %v490, %v489
        %v506 = vpack.c.b16 %v492, %v491
        %v507 = vpack.c.b16 %v494, %v493
        %v508 = vpack.c.b16 %v496, %v495
        %v509 = vpack.c.b16 %v498, %v497
        %v510 = vpack.c.b16 %v500, %v499
        %v511 = vpack.c.b16 %v502, %v501
        %v512 = vpack.c.b16 %v504, %v503
        %521 = vmatprep.subr.bf16.mxu0 0
        %522 = vmatpush1.bf16.msra.mxu0 %v505
        %523 = vmatprep.subr.bf16.mxu0 0
        %524 = vmatpush1.bf16.msra.mxu0 %v506
        %525 = vmatprep.subr.bf16.mxu0 0
        %526 = vmatpush1.bf16.msra.mxu0 %v507
        %527 = vmatprep.subr.bf16.mxu0 0
        %528 = vmatpush1.bf16.msra.mxu0 %v508
        %529 = vmatprep.subr.bf16.mxu0 0
        %530 = vmatpush1.bf16.msra.mxu0 %v509
        %531 = vmatprep.subr.bf16.mxu0 0
        %532 = vmatpush1.bf16.msra.mxu0 %v510
        %533 = vmatprep.subr.bf16.mxu0 0
        %534 = vmatpush1.bf16.msra.mxu0 %v511
        %535 = vmatprep.subr.bf16.mxu0 0
        %536 = vmatpush1.bf16.msra.mxu0 %v512
        %537 = vmatprep.subr.bf16.mxu0 0
        %538 = vmatpush1.bf16.msra.mxu0 0
        %539 = vmatprep.subr.bf16.mxu0 0
        %540 = vmatpush1.bf16.msra.mxu0 0
        %541 = vmatprep.subr.bf16.mxu0 0
        %542 = vmatpush1.bf16.msra.mxu0 0
        %543 = vmatprep.subr.bf16.mxu0 0
        %544 = vmatpush1.bf16.msra.mxu0 0
        %545 = vmatprep.subr.bf16.mxu0 0
        %546 = vmatpush1.bf16.msra.mxu0 0
        %547 = vmatprep.subr.bf16.mxu0 0
        %548 = vmatpush1.bf16.msra.mxu0 0
        %549 = vmatprep.subr.bf16.mxu0 0
        %550 = vmatpush1.bf16.msra.mxu0 0
        %551 = vmatprep.subr.bf16.mxu0 0
        %552 = vmatpush1.bf16.msra.mxu0 0
        %553 = vmatprep.mubr.bf16.mxu0 0
        %554 = vmatmul.mubr.bf16.gmra.mrb[0].mxu0 %v439
        %v555 = vpop.f32.mrb[0].mxu0
        %v556 = vadd.f32 0.0, %v555
        %v557 = vpop.f32.mrb[0].mxu0
        %v558 = vpop.f32.mrb[0].mxu0
        %v559 = vpop.f32.mrb[0].mxu0
        %560 = vdwg.mxu0
        %v561 = vlaneseq
        %v562 = vshrl.u32 %v561, 7
        %v563 = vsub.s32 0, %v562
        %v564 = vrot.slane %v556, %v563
        %v581 = vunpack.c.l.b16 %v456
        %v582 = vunpack.c.l.b16 %v457
        %v583 = vunpack.c.l.b16 %v458
        %v584 = vunpack.c.l.b16 %v459
        %v585 = vunpack.c.l.b16 %v460
        %v586 = vunpack.c.l.b16 %v461
        %v587 = vunpack.c.l.b16 %v462
        %v588 = vunpack.c.l.b16 %v463
        %v589 = vunpack.c.l.b16 %v464
        %v590 = vunpack.c.l.b16 %v465
        %v591 = vunpack.c.l.b16 %v466
        %v592 = vunpack.c.l.b16 %v467
        %v593 = vunpack.c.l.b16 %v468
        %v594 = vunpack.c.l.b16 %v469
        %v595 = vunpack.c.l.b16 %v470
        %v596 = vunpack.c.l.b16 %v471
        %v597 = vpack.c.b16 %v582, %v581
        %v598 = vpack.c.b16 %v584, %v583
        %v599 = vpack.c.b16 %v586, %v585
        %v600 = vpack.c.b16 %v588, %v587
        %v601 = vpack.c.b16 %v590, %v589
        %v602 = vpack.c.b16 %v592, %v591
        %v603 = vpack.c.b16 %v594, %v593
        %v604 = vpack.c.b16 %v596, %v595
        %613 = vmatprep.subr.bf16.mxu0 0
        %614 = vmatpush1.bf16.msra.mxu0 %v597
        %615 = vmatprep.subr.bf16.mxu0 0
        %616 = vmatpush1.bf16.msra.mxu0 %v598
        %617 = vmatprep.subr.bf16.mxu0 0
        %618 = vmatpush1.bf16.msra.mxu0 %v599
        %619 = vmatprep.subr.bf16.mxu0 0
        %620 = vmatpush1.bf16.msra.mxu0 %v600
        %621 = vmatprep.subr.bf16.mxu0 0
        %622 = vmatpush1.bf16.msra.mxu0 %v601
        %623 = vmatprep.subr.bf16.mxu0 0
        %624 = vmatpush1.bf16.msra.mxu0 %v602
        %625 = vmatprep.subr.bf16.mxu0 0
        %626 = vmatpush1.bf16.msra.mxu0 %v603
        %627 = vmatprep.subr.bf16.mxu0 0
        %628 = vmatpush1.bf16.msra.mxu0 %v604
        %629 = vmatprep.subr.bf16.mxu0 0
        %630 = vmatpush1.bf16.msra.mxu0 0
        %631 = vmatprep.subr.bf16.mxu0 0
        %632 = vmatpush1.bf16.msra.mxu0 0
        %633 = vmatprep.subr.bf16.mxu0 0
        %634 = vmatpush1.bf16.msra.mxu0 0
        %635 = vmatprep.subr.bf16.mxu0 0
        %636 = vmatpush1.bf16.msra.mxu0 0
        %637 = vmatprep.subr.bf16.mxu0 0
        %638 = vmatpush1.bf16.msra.mxu0 0
        %639 = vmatprep.subr.bf16.mxu0 0
        %640 = vmatpush1.bf16.msra.mxu0 0
        %641 = vmatprep.subr.bf16.mxu0 0
        %642 = vmatpush1.bf16.msra.mxu0 0
        %643 = vmatprep.subr.bf16.mxu0 0
        %644 = vmatpush1.bf16.msra.mxu0 0
        %645 = vmatprep.mubr.bf16.mxu0 0
        %646 = vmatmul.mubr.bf16.gmra.mrb[0].mxu0 %v438
        %v647 = vpop.f32.mrb[0].mxu0
        %v648 = vadd.f32 %v564, %v647
        %v649 = vpop.f32.mrb[0].mxu0
        %v650 = vpop.f32.mrb[0].mxu0
        %v651 = vpop.f32.mrb[0].mxu0
        %652 = vdwg.mxu0
        %v654 = vlaneseq
        %v655 = vshrl.u32 %v654, 7
        %v656 = vsub.s32 0, %v655
        %v657 = vrot.slane %v472, %v656
        %v659 = vadd.f32 %v648, %v657
        %v660 = vmax.f32 %v659, 0.0
        %v661 = vld [vmem:[#allocation8] sm:$0xf]
        %v662 = vld [vmem:[#allocation8 + $0x4] sm:$0xf]
        %v663 = vld [vmem:[#allocation8 + $0x8] sm:$0xf]
        %v664 = vld [vmem:[#allocation8 + $0xc] sm:$0xf]
        %v665 = vld [vmem:[#allocation8 + $0x10] sm:$0xf]
        %v666 = vld [vmem:[#allocation8 + $0x14] sm:$0xf]
        %v667 = vld [vmem:[#allocation8 + $0x18] sm:$0xf]
        %v668 = vld [vmem:[#allocation8 + $0x1c] sm:$0xf]
        %v669 = vld [vmem:[#allocation8 + $0x20] sm:$0xf]
        %v670 = vld [vmem:[#allocation8 + $0x24] sm:$0xf]
        %v671 = vld [vmem:[#allocation8 + $0x28] sm:$0xf]
        %v672 = vld [vmem:[#allocation8 + $0x2c] sm:$0xf]
        %v673 = vld [vmem:[#allocation8 + $0x30] sm:$0xf]
        %v674 = vld [vmem:[#allocation8 + $0x34] sm:$0xf]
        %v675 = vld [vmem:[#allocation8 + $0x38] sm:$0xf]
        %v676 = vld [vmem:[#allocation8 + $0x3c] sm:$0xf]
        %v677 = vld [vmem:[%s6] sm:$0x1]
        %v678 = vpack.c.bf16 %v660, %v660
        %v680 = vlaneseq
        %v681 = vshrl.u32 %v680, 7
        %v682 = vsub.s32 0, %v681
        %v683 = vrot.slane %v677, %v682
        %v701 = vunpack.c.l.b16 %v661
        %v702 = vunpack.c.l.b16 %v662
        %v703 = vunpack.c.l.b16 %v663
        %v704 = vunpack.c.l.b16 %v664
        %v705 = vunpack.c.l.b16 %v665
        %v706 = vunpack.c.l.b16 %v666
        %v707 = vunpack.c.l.b16 %v667
        %v708 = vunpack.c.l.b16 %v668
        %v709 = vunpack.c.l.b16 %v669
        %v710 = vunpack.c.l.b16 %v670
        %v711 = vunpack.c.l.b16 %v671
        %v712 = vunpack.c.l.b16 %v672
        %v713 = vunpack.c.l.b16 %v673
        %v714 = vunpack.c.l.b16 %v674
        %v715 = vunpack.c.l.b16 %v675
        %v716 = vunpack.c.l.b16 %v676
        %v717 = vpack.c.b16 %v702, %v701
        %v718 = vpack.c.b16 %v704, %v703
        %v719 = vpack.c.b16 %v706, %v705
        %v720 = vpack.c.b16 %v708, %v707
        %v721 = vpack.c.b16 %v710, %v709
        %v722 = vpack.c.b16 %v712, %v711
        %v723 = vpack.c.b16 %v714, %v713
        %v724 = vpack.c.b16 %v716, %v715
        %733 = vmatprep.subr.bf16.mxu0 0
        %734 = vmatpush1.bf16.msra.mxu0 %v717
        %735 = vmatprep.subr.bf16.mxu0 0
        %736 = vmatpush1.bf16.msra.mxu0 %v718
        %737 = vmatprep.subr.bf16.mxu0 0
        %738 = vmatpush1.bf16.msra.mxu0 %v719
        %739 = vmatprep.subr.bf16.mxu0 0
        %740 = vmatpush1.bf16.msra.mxu0 %v720
        %741 = vmatprep.subr.bf16.mxu0 0
        %742 = vmatpush1.bf16.msra.mxu0 %v721
        %743 = vmatprep.subr.bf16.mxu0 0
        %744 = vmatpush1.bf16.msra.mxu0 %v722
        %745 = vmatprep.subr.bf16.mxu0 0
        %746 = vmatpush1.bf16.msra.mxu0 %v723
        %747 = vmatprep.subr.bf16.mxu0 0
        %748 = vmatpush1.bf16.msra.mxu0 %v724
        %749 = vmatprep.subr.bf16.mxu0 0
        %750 = vmatpush1.bf16.msra.mxu0 0
        %751 = vmatprep.subr.bf16.mxu0 0
        %752 = vmatpush1.bf16.msra.mxu0 0
        %753 = vmatprep.subr.bf16.mxu0 0
        %754 = vmatpush1.bf16.msra.mxu0 0
        %755 = vmatprep.subr.bf16.mxu0 0
        %756 = vmatpush1.bf16.msra.mxu0 0
        %757 = vmatprep.subr.bf16.mxu0 0
        %758 = vmatpush1.bf16.msra.mxu0 0
        %759 = vmatprep.subr.bf16.mxu0 0
        %760 = vmatpush1.bf16.msra.mxu0 0
        %761 = vmatprep.subr.bf16.mxu0 0
        %762 = vmatpush1.bf16.msra.mxu0 0
        %763 = vmatprep.subr.bf16.mxu0 0
        %764 = vmatpush1.bf16.msra.mxu0 0
        %765 = vmatprep.mubr.bf16.mxu0 0
        %766 = vmatmul.mubr.bf16.gmra.mrb[0].mxu0 %v678
        %v767 = vpop.f32.mrb[0].mxu0
        %v768 = vadd.f32 %v683, %v767
        %v769 = vpop.f32.mrb[0].mxu0
        %v770 = vpop.f32.mrb[0].mxu0
        %v771 = vpop.f32.mrb[0].mxu0
        %772 = vdwg.mxu0
        %v773 = vmax.f32 %v768, 0.0
        %v774 = vld [vmem:[#allocation10] sm:$0xf]
        %v775 = vld [vmem:[#allocation10 + $0x4] sm:$0xf]
        %v776 = vld [vmem:[#allocation10 + $0x8] sm:$0xf]
        %v777 = vld [vmem:[#allocation10 + $0xc] sm:$0xf]
        %v778 = vld [vmem:[#allocation10 + $0x10] sm:$0xf]
        %v779 = vld [vmem:[#allocation10 + $0x14] sm:$0xf]
        %v780 = vld [vmem:[#allocation10 + $0x18] sm:$0xf]
        %v781 = vld [vmem:[#allocation10 + $0x1c] sm:$0xf]
        %v782 = vld [vmem:[#allocation10 + $0x20] sm:$0xf]
        %v783 = vld [vmem:[#allocation10 + $0x24] sm:$0xf]
        %v784 = vld [vmem:[#allocation10 + $0x28] sm:$0xf]
        %v785 = vld [vmem:[#allocation10 + $0x2c] sm:$0xf]
        %v786 = vld [vmem:[#allocation10 + $0x30] sm:$0xf]
        %v787 = vld [vmem:[#allocation10 + $0x34] sm:$0xf]
        %v788 = vld [vmem:[#allocation10 + $0x38] sm:$0xf]
        %v789 = vld [vmem:[#allocation10 + $0x3c] sm:$0xf]
        %v790 = vld [vmem:[%s8] sm:$0x1]
        %v791 = vpack.c.bf16 %v773, %v773
        %v793 = vlaneseq
        %v794 = vshrl.u32 %v793, 7
        %v795 = vsub.s32 0, %v794
        %v796 = vrot.slane %v790, %v795
        %v814 = vunpack.c.l.b16 %v774
        %v815 = vunpack.c.l.b16 %v775
        %v816 = vunpack.c.l.b16 %v776
        %v817 = vunpack.c.l.b16 %v777
        %v818 = vunpack.c.l.b16 %v778
        %v819 = vunpack.c.l.b16 %v779
        %v820 = vunpack.c.l.b16 %v780
        %v821 = vunpack.c.l.b16 %v781
        %v822 = vunpack.c.l.b16 %v782
        %v823 = vunpack.c.l.b16 %v783
        %v824 = vunpack.c.l.b16 %v784
        %v825 = vunpack.c.l.b16 %v785
        %v826 = vunpack.c.l.b16 %v786
        %v827 = vunpack.c.l.b16 %v787
        %v828 = vunpack.c.l.b16 %v788
        %v829 = vunpack.c.l.b16 %v789
        %v830 = vpack.c.b16 %v815, %v814
        %v831 = vpack.c.b16 %v817, %v816
        %v832 = vpack.c.b16 %v819, %v818
        %v833 = vpack.c.b16 %v821, %v820
        %v834 = vpack.c.b16 %v823, %v822
        %v835 = vpack.c.b16 %v825, %v824
        %v836 = vpack.c.b16 %v827, %v826
        %v837 = vpack.c.b16 %v829, %v828
        %846 = vmatprep.subr.bf16.mxu0 0
        %847 = vmatpush1.bf16.msra.mxu0 %v830
        %848 = vmatprep.subr.bf16.mxu0 0
        %849 = vmatpush1.bf16.msra.mxu0 %v831
        %850 = vmatprep.subr.bf16.mxu0 0
        %851 = vmatpush1.bf16.msra.mxu0 %v832
        %852 = vmatprep.subr.bf16.mxu0 0
        %853 = vmatpush1.bf16.msra.mxu0 %v833
        %854 = vmatprep.subr.bf16.mxu0 0
        %855 = vmatpush1.bf16.msra.mxu0 %v834
        %856 = vmatprep.subr.bf16.mxu0 0
        %857 = vmatpush1.bf16.msra.mxu0 %v835
        %858 = vmatprep.subr.bf16.mxu0 0
        %859 = vmatpush1.bf16.msra.mxu0 %v836
        %860 = vmatprep.subr.bf16.mxu0 0
        %861 = vmatpush1.bf16.msra.mxu0 %v837
        %862 = vmatprep.subr.bf16.mxu0 0
        %863 = vmatpush1.bf16.msra.mxu0 0
        %864 = vmatprep.subr.bf16.mxu0 0
        %865 = vmatpush1.bf16.msra.mxu0 0
        %866 = vmatprep.subr.bf16.mxu0 0
        %867 = vmatpush1.bf16.msra.mxu0 0
        %868 = vmatprep.subr.bf16.mxu0 0
        %869 = vmatpush1.bf16.msra.mxu0 0
        %870 = vmatprep.subr.bf16.mxu0 0
        %871 = vmatpush1.bf16.msra.mxu0 0
        %872 = vmatprep.subr.bf16.mxu0 0
        %873 = vmatpush1.bf16.msra.mxu0 0
        %874 = vmatprep.subr.bf16.mxu0 0
        %875 = vmatpush1.bf16.msra.mxu0 0
        %876 = vmatprep.subr.bf16.mxu0 0
        %877 = vmatpush1.bf16.msra.mxu0 0
        %878 = vmatprep.mubr.bf16.mxu0 0
        %879 = vmatmul.mubr.bf16.gmra.mrb[0].mxu0 %v791
        %v880 = vpop.f32.mrb[0].mxu0
        %v881 = vadd.f32 %v796, %v880
        %v882 = vpop.f32.mrb[0].mxu0
        %v883 = vpop.f32.mrb[0].mxu0
        %v884 = vpop.f32.mrb[0].mxu0
        %885 = vdwg.mxu0
        %v886 = vlaneseq
        %v887 = vand.u32 %v886, 127
        %vm888 = vcmp.ge.s32.totalorder %v887, 8
        %vm889 = vcmp.lt.s32.totalorder %v887, 16
        %vm890 = vmand %vm888, %vm889
        %v891 = vmax.f32 %v881, 0.0
        %v892 = vand.u32 2147483647, %v881
        %v893 = vsub.f32 0.0, %v892
        %v894 = vmul.f32 %v893, 1.442695
        %v895 = vpow.pop %v894
        %v896 = vadd.f32 %v895, 1.0
        %v897 = vlog2.pop %v896
        %v898 = vmul.f32 %v897, 0.6931472
        %v899 = vadd.f32 %v891, %v898
        %v900 = vmax.f32 %v899, 0.01
        %v901 = vsel %vm890, %v900, %v881
        %902 = vst [vmem:[%s433] sm:$0xff] %v901
        %s903 = sand.u32 %s251, 1
        %s904 = scalar_lea.sflag [#allocation4], %s903
        %s905 = sand.u32 %s251, 1
        %s906 = smul.addr %s905, 8
        %s907 = scalar_lea.vmem [#allocation11], %s906
        // Predicated region
        $region77: #{tpu_custom_call.1} parent=55 // pred_check
          %p908 = pneg %p261
        $region78: #{tpu_custom_call.1} parent=55 // pred_check_branch
          %910 = sbr.rel (%p908) target = $region80
        $region79: #{tpu_custom_call.1} parent=55 // pred_region
          %s912 = ssub.s32 128, 128
          %913 = vsyncadd %s904, %s912
          %s914 = sadd.s32 %s33, %s32
          %s915 = smul.addr %s914, 128
          %s916 = scalar_lea.hbm %s9, %s915
          %s918 = sshll.u32 %s907, 4
          %s919 = int_to_ptr.vmem [resolvable:$true] %s918
          %921 = dma.vmem_to_hbm [thread:$0]  %s919, 128, %s916, %s904
        $region80: #{tpu_custom_call.1} parent=55 // pred_fallthru
          _
      $region56: #{tpu_custom_call.1} parent=5 // pred_fallthru
        _
      %p922 = scmp.le.s32.totalorder 2, %s23
      // Predicated region
      $region81: #{tpu_custom_call.1} parent=5 // pred_check
        %p923 = pneg %p922
      $region82: #{tpu_custom_call.1} parent=5 // pred_check_branch
        %925 = sbr.rel (%p923) target = $region84
      $region83: #{tpu_custom_call.1} parent=5 // pred_region
        %s926 = ssub.s32 %s23, 2
        // Predicated region
        $region85: #{tpu_custom_call.1} parent=83 // pred_check
          %p927 = pneg %p267
        $region86: #{tpu_custom_call.1} parent=83 // pred_check_branch
          %929 = sbr.rel (%p927) target = $region88
        $region87: #{tpu_custom_call.1} parent=83 // pred_region
          %s930 = sand.u32 %s252, 1
          %s931 = scalar_lea.sflag [#allocation4], %s930
          %s932 = sand.u32 %s252, 1
          %s933 = smul.addr %s932, 8
          %s934 = scalar_lea.vmem [#allocation11], %s933
          %935 = dma.done %s931, 128
        $region88: #{tpu_custom_call.1} parent=83 // pred_fallthru
          _
      $region84: #{tpu_custom_call.1} parent=5 // pred_fallthru
        _
    $region6: #{tpu_custom_call.1} parent=1 // loop_footer
      %s27 = sadd.s32 1, %s23
    $region7: #{tpu_custom_call.1} parent=1 // loop_footer_branch
      %22 = sbr.rel target = $region3
    $region8: #{tpu_custom_call.1} parent=1 // loop_exit
      _
    %936 = vsyncpa [#allocation3], 1
    %s937 = scalar_lea.sflag [#allocation3], 1
    %938 = vsyncpa %s937, 1
    %939 = vsyncpa [#allocation6], 1
    %940 = vsyncpa [#allocation9], 1
    %941 = vsyncpa [#allocation4], 1
    %s942 = scalar_lea.sflag [#allocation4], 1
    %943 = vsyncpa %s942, 1

</llo_original>
